<compile_context>
chip_gen: v5e
topology: v5e:2x2
jax: 0.10.0
libtpu: 0.0.40
codegen_flags: <defaults>
</compile_context>

<pallas_src>
import jax
import jax.numpy as jnp
from jax.experimental import pallas as pl
from jax.experimental.pallas import tpu as pltpu

IN_DIM = 10
OUT_DIM = 2
PAD_IN = 16                                    # input features 10 -> 16 (bf16 pack)
DIMS = [PAD_IN, 512, 256, 128, 64, OUT_DIM]    # padded layer widths (for cost est.)


def mouse_mlp_kernel(x_ref,
                     w1_ref, b1_ref,
                     w2_ref, b2_ref,
                     w3_ref, b3_ref,
                     w4_ref, b4_ref,
                     w5_ref, b5_ref,
                     o_ref):
    # bf16 MXU inputs, f32 accumulation; bias-add + ReLU on the VPU in f32.
    x = x_ref[...]                                     # bf16 [tile_m, 16]

    # fc1 + relu
    h = jnp.dot(x, w1_ref[...], preferred_element_type=jnp.float32) + b1_ref[...]
    h = jnp.maximum(h, 0.0)
    # fc2 + relu
    h = jnp.dot(h.astype(jnp.bfloat16), w2_ref[...],
                preferred_element_type=jnp.float32) + b2_ref[...]
    h = jnp.maximum(h, 0.0)
    # dropout(0.5) -> identity in eval mode
    # TODO(synk): train-mode dropout would need pltpu.prng_seed/prng_random_bits
    #             and a 1/keep_prob rescale.
    # fc3 + relu
    h = jnp.dot(h.astype(jnp.bfloat16), w3_ref[...],
                preferred_element_type=jnp.float32) + b3_ref[...]
    h = jnp.maximum(h, 0.0)
    # fc4 + relu
    h = jnp.dot(h.astype(jnp.bfloat16), w4_ref[...],
                preferred_element_type=jnp.float32) + b4_ref[...]
    h = jnp.maximum(h, 0.0)
    # fc5 (no activation); stored un-padded as (tile_m, 2) f32
    out = jnp.dot(h.astype(jnp.bfloat16), w5_ref[...],
                  preferred_element_type=jnp.float32) + b5_ref[...]
    o_ref[...] = out.astype(o_ref.dtype)


def _tensorcores_per_chip():
    """Best-effort TensorCores-per-chip count (v7x has 2); only used to size the grid."""
    try:
        kind = jax.devices()[0].device_kind.lower()
        if "v7" in kind:
            return 2
    except Exception:
        pass
    return 1


def _round_up(n, m):
    return -(-n // m) * m


def mouse_mlp_forward(x, params, *, tile_m=1024, min_grid_steps=None):
    """x: [B, 10] f32.  params: list of (W [in, out] f32, b [1, out] f32)
    in the original (unpadded) sizes, pre-transposed from torch's [out, in]."""
    B, D = x.shape
    assert D == IN_DIM
    assert tile_m % 16 == 0  # bf16 x-block sublane packing (and >= 8 for f32 out)

    if min_grid_steps is None:
        min_grid_steps = _tensorcores_per_chip()

    # Adaptive batch tile: never pad a tiny batch up to a full tile, and on
    # multi-TensorCore chips cap the tile so the "parallel" grid has >= 2 steps.
    Bp16 = _round_up(B, 16)
    tile = min(tile_m, Bp16)
    if min_grid_steps > 1:
        tile = min(tile, max(16, _round_up(-(-Bp16 // min_grid_steps), 16)))
    tile = _round_up(tile, 16)
    Bp = _round_up(Bp16, tile)

    # Fused cast+pad: bf16 first, then zero-pad batch rows and features 10 -> 16.
    xp = jnp.pad(x.astype(jnp.bfloat16), ((0, Bp - B), (0, PAD_IN - IN_DIM)))

    # Zero-pad fc1 rows (K: 10 -> 16); weights -> bf16, biases stay f32.
    padded = []
    for li, (w, b) in enumerate(params):
        if li == 0:
            w = jnp.pad(w, ((0, PAD_IN - IN_DIM), (0, 0)))
        padded.append((w.astype(jnp.bfloat16), b.astype(jnp.float32)))

    flat_params = []
    weight_specs = []
    for (w, b) in padded:
        # Full-array, grid-invariant blocks (weights resident in VMEM each step).
        weight_specs.append(pl.BlockSpec(w.shape, lambda i: (0, 0)))
        weight_specs.append(pl.BlockSpec(b.shape, lambda i: (0, 0)))
        flat_params.extend([w, b])

    grid = (Bp // tile,)
    flops = 2 * Bp * sum(DIMS[i] * DIMS[i + 1] for i in range(len(DIMS) - 1))
    bytes_accessed = (xp.size * 2 + Bp * OUT_DIM * 4
                      + sum(w.size * 2 + b.size * 4 for (w, b) in padded))

    out = pl.pallas_call(
        mouse_mlp_kernel,
        out_shape=jax.ShapeDtypeStruct((Bp, OUT_DIM), jnp.float32),
        grid_spec=pltpu.PrefetchScalarGridSpec(
            num_scalar_prefetch=0,
            grid=grid,
            in_specs=[pl.BlockSpec((tile, PAD_IN), lambda i: (i, 0))]
                     + weight_specs,
            out_specs=pl.BlockSpec((tile, OUT_DIM), lambda i: (i, 0)),
        ),
        compiler_params=pltpu.CompilerParams(
            dimension_semantics=("parallel",),
            vmem_limit_bytes=32 * 1024 * 1024),
        cost_estimate=pl.CostEstimate(
            flops=flops, transcendentals=0, bytes_accessed=bytes_accessed),
    )(xp, *flat_params)

    return out[:B, :]


def init_params(key):
    """Deterministic init matching nn.Linear fan-in init (stored as [in, out])."""
    dims = [IN_DIM, 512, 256, 128, 64, OUT_DIM]
    params = []
    for i in range(len(dims) - 1):
        fan_in, fan_out = dims[i], dims[i + 1]
        key, kw, kb = jax.random.split(key, 3)
        bound = 1.0 / jnp.sqrt(fan_in)
        w = jax.random.uniform(kw, (fan_in, fan_out), jnp.float32, -bound, bound)
        b = jax.random.uniform(kb, (1, fan_out), jnp.float32, -bound, bound)
        params.append((w, b))
    return params


def reference_forward(x, params, *, emulate_bf16=False):
    h = x
    for i, (w, b) in enumerate(params):
        if emulate_bf16:
            h = jnp.dot(h.astype(jnp.bfloat16), w.astype(jnp.bfloat16),
                        preferred_element_type=jnp.float32) + b
        else:
            h = h @ w + b
        if i < len(params) - 1:
            h = jnp.maximum(h, 0.0)
    return h


if __name__ == "__main__":
    key = jax.random.PRNGKey(0)
    key, kx = jax.random.split(key)

    B = 16  # small batch; adaptive tiling keeps this as a single 16-row tile
    x = jax.random.normal(kx, (B, IN_DIM), jnp.float32)
    params = init_params(key)

    y = mouse_mlp_forward(x, params)
    y = jax.block_until_ready(y)
    assert y.shape == (B, OUT_DIM)

    # Bit-level-close check against a bf16-input / f32-accumulate reference.
    y_bf16_ref = reference_forward(x, params, emulate_bf16=True)
    assert jnp.allclose(y, y_bf16_ref, atol=1e-3, rtol=1e-3)

    # Sanity check against the pure-f32 reference (bf16 rounding tolerance).
    y_f32_ref = reference_forward(x, params, emulate_bf16=False)
    assert jnp.allclose(y, y_f32_ref, atol=5e-2, rtol=5e-2)

    # Multi-tile grid path: batch not a multiple of the tile, grid > 1 steps.
    key, kx2 = jax.random.split(key)
    B2 = 40
    x2 = jax.random.normal(kx2, (B2, IN_DIM), jnp.float32)
    y2 = jax.block_until_ready(mouse_mlp_forward(x2, params, tile_m=16))
    assert y2.shape == (B2, OUT_DIM)
    y2_ref = reference_forward(x2, params, emulate_bf16=True)
    assert jnp.allclose(y2, y2_ref, atol=1e-3, rtol=1e-3)

    print("KERNEL_OK")
</pallas_src>

<mosaic_0001>
module attributes {stable_mosaic.version = 11 : i64} {
  func.func @mouse_mlp_kernel(%arg0: i32, %arg1: memref<16x16xbf16, #tpu.memory_space<vmem>>, %arg2: memref<16x512xbf16, #tpu.memory_space<vmem>>, %arg3: memref<1x512xf32, #tpu.memory_space<vmem>>, %arg4: memref<512x256xbf16, #tpu.memory_space<vmem>>, %arg5: memref<1x256xf32, #tpu.memory_space<vmem>>, %arg6: memref<256x128xbf16, #tpu.memory_space<vmem>>, %arg7: memref<1x128xf32, #tpu.memory_space<vmem>>, %arg8: memref<128x64xbf16, #tpu.memory_space<vmem>>, %arg9: memref<1x64xf32, #tpu.memory_space<vmem>>, %arg10: memref<64x2xbf16, #tpu.memory_space<vmem>>, %arg11: memref<1x2xf32, #tpu.memory_space<vmem>>, %arg12: memref<16x2xf32, #tpu.memory_space<vmem>>) attributes {dimension_semantics = [#tpu.dimension_semantics<parallel>], iteration_bounds = array<i64: 1>, scalar_prefetch = 0 : i64, scratch_operands = 0 : i64, tpu.core_type = #tpu.core_type<tc>, window_params = [{transform_indices = @transform_0, window_bounds = array<i64: 16, 16>}, {pipeline_mode = #tpu.pipeline_mode<synchronous>, transform_indices = @transform_1, window_bounds = array<i64: 16, 512>}, {pipeline_mode = #tpu.pipeline_mode<synchronous>, transform_indices = @transform_2, window_bounds = array<i64: 1, 512>}, {pipeline_mode = #tpu.pipeline_mode<synchronous>, transform_indices = @transform_3, window_bounds = array<i64: 512, 256>}, {pipeline_mode = #tpu.pipeline_mode<synchronous>, transform_indices = @transform_4, window_bounds = array<i64: 1, 256>}, {pipeline_mode = #tpu.pipeline_mode<synchronous>, transform_indices = @transform_5, window_bounds = array<i64: 256, 128>}, {pipeline_mode = #tpu.pipeline_mode<synchronous>, transform_indices = @transform_6, window_bounds = array<i64: 1, 128>}, {pipeline_mode = #tpu.pipeline_mode<synchronous>, transform_indices = @transform_7, window_bounds = array<i64: 128, 64>}, {pipeline_mode = #tpu.pipeline_mode<synchronous>, transform_indices = @transform_8, window_bounds = array<i64: 1, 64>}, {pipeline_mode = #tpu.pipeline_mode<synchronous>, transform_indices = @transform_9, window_bounds = array<i64: 64, 2>}, {pipeline_mode = #tpu.pipeline_mode<synchronous>, transform_indices = @transform_10, window_bounds = array<i64: 1, 2>}, {transform_indices = @transform_11, window_bounds = array<i64: 16, 2>}]} {
    %c0 = arith.constant 0 : index
    %c0_0 = arith.constant 0 : index
    %0 = vector.load %arg1[%c0, %c0_0] : memref<16x16xbf16, #tpu.memory_space<vmem>>, vector<16x16xbf16>
    %c0_1 = arith.constant 0 : index
    %c0_2 = arith.constant 0 : index
    %1 = vector.load %arg2[%c0_1, %c0_2] : memref<16x512xbf16, #tpu.memory_space<vmem>>, vector<16x512xbf16>
    %cst = arith.constant dense<0.000000e+00> : vector<16x512xf32>
    %2 = tpu.matmul %0, %1, %cst {dimension_numbers = #tpu.dot_dimension_numbers<[1], [0], [0], [1], [0, 0, 1, 1], [], []>} : vector<16x16xbf16>, vector<16x512xbf16>, vector<16x512xf32> -> vector<16x512xf32>
    %c0_3 = arith.constant 0 : index
    %c0_4 = arith.constant 0 : index
    %3 = vector.load %arg3[%c0_3, %c0_4] : memref<1x512xf32, #tpu.memory_space<vmem>>, vector<1x512xf32>
    %4 = vector.broadcast %3 : vector<1x512xf32> to vector<16x512xf32>
    %5 = arith.addf %2, %4 : vector<16x512xf32>
    %cst_5 = arith.constant 0.000000e+00 : f32
    %6 = vector.broadcast %cst_5 : f32 to vector<16x512xf32>
    %7 = arith.maximumf %5, %6 : vector<16x512xf32>
    %8 = arith.truncf %7 : vector<16x512xf32> to vector<16x512xbf16>
    %c0_6 = arith.constant 0 : index
    %c0_7 = arith.constant 0 : index
    %9 = vector.load %arg4[%c0_6, %c0_7] : memref<512x256xbf16, #tpu.memory_space<vmem>>, vector<512x256xbf16>
    %cst_8 = arith.constant dense<0.000000e+00> : vector<16x256xf32>
    %10 = tpu.matmul %8, %9, %cst_8 {dimension_numbers = #tpu.dot_dimension_numbers<[1], [0], [0], [1], [0, 0, 1, 1], [], []>} : vector<16x512xbf16>, vector<512x256xbf16>, vector<16x256xf32> -> vector<16x256xf32>
    %c0_9 = arith.constant 0 : index
    %c0_10 = arith.constant 0 : index
    %11 = vector.load %arg5[%c0_9, %c0_10] : memref<1x256xf32, #tpu.memory_space<vmem>>, vector<1x256xf32>
    %12 = vector.broadcast %11 : vector<1x256xf32> to vector<16x256xf32>
    %13 = arith.addf %10, %12 : vector<16x256xf32>
    %cst_11 = arith.constant 0.000000e+00 : f32
    %14 = vector.broadcast %cst_11 : f32 to vector<16x256xf32>
    %15 = arith.maximumf %13, %14 : vector<16x256xf32>
    %16 = arith.truncf %15 : vector<16x256xf32> to vector<16x256xbf16>
    %c0_12 = arith.constant 0 : index
    %c0_13 = arith.constant 0 : index
    %17 = vector.load %arg6[%c0_12, %c0_13] : memref<256x128xbf16, #tpu.memory_space<vmem>>, vector<256x128xbf16>
    %cst_14 = arith.constant dense<0.000000e+00> : vector<16x128xf32>
    %18 = tpu.matmul %16, %17, %cst_14 {dimension_numbers = #tpu.dot_dimension_numbers<[1], [0], [0], [1], [0, 0, 1, 1], [], []>} : vector<16x256xbf16>, vector<256x128xbf16>, vector<16x128xf32> -> vector<16x128xf32>
    %c0_15 = arith.constant 0 : index
    %c0_16 = arith.constant 0 : index
    %19 = vector.load %arg7[%c0_15, %c0_16] : memref<1x128xf32, #tpu.memory_space<vmem>>, vector<1x128xf32>
    %20 = vector.broadcast %19 : vector<1x128xf32> to vector<16x128xf32>
    %21 = arith.addf %18, %20 : vector<16x128xf32>
    %cst_17 = arith.constant 0.000000e+00 : f32
    %22 = vector.broadcast %cst_17 : f32 to vector<16x128xf32>
    %23 = arith.maximumf %21, %22 : vector<16x128xf32>
    %24 = arith.truncf %23 : vector<16x128xf32> to vector<16x128xbf16>
    %c0_18 = arith.constant 0 : index
    %c0_19 = arith.constant 0 : index
    %25 = vector.load %arg8[%c0_18, %c0_19] : memref<128x64xbf16, #tpu.memory_space<vmem>>, vector<128x64xbf16>
    %cst_20 = arith.constant dense<0.000000e+00> : vector<16x64xf32>
    %26 = tpu.matmul %24, %25, %cst_20 {dimension_numbers = #tpu.dot_dimension_numbers<[1], [0], [0], [1], [0, 0, 1, 1], [], []>} : vector<16x128xbf16>, vector<128x64xbf16>, vector<16x64xf32> -> vector<16x64xf32>
    %c0_21 = arith.constant 0 : index
    %c0_22 = arith.constant 0 : index
    %27 = vector.load %arg9[%c0_21, %c0_22] : memref<1x64xf32, #tpu.memory_space<vmem>>, vector<1x64xf32>
    %28 = vector.broadcast %27 : vector<1x64xf32> to vector<16x64xf32>
    %29 = arith.addf %26, %28 : vector<16x64xf32>
    %cst_23 = arith.constant 0.000000e+00 : f32
    %30 = vector.broadcast %cst_23 : f32 to vector<16x64xf32>
    %31 = arith.maximumf %29, %30 : vector<16x64xf32>
    %32 = arith.truncf %31 : vector<16x64xf32> to vector<16x64xbf16>
    %c0_24 = arith.constant 0 : index
    %c0_25 = arith.constant 0 : index
    %33 = vector.load %arg10[%c0_24, %c0_25] : memref<64x2xbf16, #tpu.memory_space<vmem>>, vector<64x2xbf16>
    %cst_26 = arith.constant dense<0.000000e+00> : vector<16x2xf32>
    %34 = tpu.matmul %32, %33, %cst_26 {dimension_numbers = #tpu.dot_dimension_numbers<[1], [0], [0], [1], [0, 0, 1, 1], [], []>} : vector<16x64xbf16>, vector<64x2xbf16>, vector<16x2xf32> -> vector<16x2xf32>
    %c0_27 = arith.constant 0 : index
    %c0_28 = arith.constant 0 : index
    %35 = vector.load %arg11[%c0_27, %c0_28] : memref<1x2xf32, #tpu.memory_space<vmem>>, vector<1x2xf32>
    %36 = vector.broadcast %35 : vector<1x2xf32> to vector<16x2xf32>
    %37 = arith.addf %34, %36 : vector<16x2xf32>
    %c0_29 = arith.constant 0 : index
    %c0_30 = arith.constant 0 : index
    %38 = vector.load %arg12[%c0_29, %c0_30] : memref<16x2xf32, #tpu.memory_space<vmem>>, vector<16x2xf32>
    tpu.vector_store %arg12[%c0_29, %c0_30], %37 {strides = array<i32>} : memref<16x2xf32, #tpu.memory_space<vmem>>, vector<16x2xf32>,
    return
  }
  func.func @transform_0(%arg0: i32) -> (i32, i32) {
    %c0_i32 = arith.constant 0 : i32
    %c0_i32_0 = arith.constant 0 : i32
    return %arg0, %c0_i32 : i32, i32
  }
  func.func @transform_1(%arg0: i32) -> (i32, i32) {
    %c0_i32 = arith.constant 0 : i32
    %c0_i32_0 = arith.constant 0 : i32
    %c0_i32_1 = arith.constant 0 : i32
    return %c0_i32, %c0_i32_0 : i32, i32
  }
  func.func @transform_2(%arg0: i32) -> (i32, i32) {
    %c0_i32 = arith.constant 0 : i32
    %c0_i32_0 = arith.constant 0 : i32
    %c0_i32_1 = arith.constant 0 : i32
    return %c0_i32, %c0_i32_0 : i32, i32
  }
  func.func @transform_3(%arg0: i32) -> (i32, i32) {
    %c0_i32 = arith.constant 0 : i32
    %c0_i32_0 = arith.constant 0 : i32
    %c0_i32_1 = arith.constant 0 : i32
    return %c0_i32, %c0_i32_0 : i32, i32
  }
  func.func @transform_4(%arg0: i32) -> (i32, i32) {
    %c0_i32 = arith.constant 0 : i32
    %c0_i32_0 = arith.constant 0 : i32
    %c0_i32_1 = arith.constant 0 : i32
    return %c0_i32, %c0_i32_0 : i32, i32
  }
  func.func @transform_5(%arg0: i32) -> (i32, i32) {
    %c0_i32 = arith.constant 0 : i32
    %c0_i32_0 = arith.constant 0 : i32
    %c0_i32_1 = arith.constant 0 : i32
    return %c0_i32, %c0_i32_0 : i32, i32
  }
  func.func @transform_6(%arg0: i32) -> (i32, i32) {
    %c0_i32 = arith.constant 0 : i32
    %c0_i32_0 = arith.constant 0 : i32
    %c0_i32_1 = arith.constant 0 : i32
    return %c0_i32, %c0_i32_0 : i32, i32
  }
  func.func @transform_7(%arg0: i32) -> (i32, i32) {
    %c0_i32 = arith.constant 0 : i32
    %c0_i32_0 = arith.constant 0 : i32
    %c0_i32_1 = arith.constant 0 : i32
    return %c0_i32, %c0_i32_0 : i32, i32
  }
  func.func @transform_8(%arg0: i32) -> (i32, i32) {
    %c0_i32 = arith.constant 0 : i32
    %c0_i32_0 = arith.constant 0 : i32
    %c0_i32_1 = arith.constant 0 : i32
    return %c0_i32, %c0_i32_0 : i32, i32
  }
  func.func @transform_9(%arg0: i32) -> (i32, i32) {
    %c0_i32 = arith.constant 0 : i32
    %c0_i32_0 = arith.constant 0 : i32
    %c0_i32_1 = arith.constant 0 : i32
    return %c0_i32, %c0_i32_0 : i32, i32
  }
  func.func @transform_10(%arg0: i32) -> (i32, i32) {
    %c0_i32 = arith.constant 0 : i32
    %c0_i32_0 = arith.constant 0 : i32
    %c0_i32_1 = arith.constant 0 : i32
    return %c0_i32, %c0_i32_0 : i32, i32
  }
  func.func @transform_11(%arg0: i32) -> (i32, i32) {
    %c0_i32 = arith.constant 0 : i32
    %c0_i32_0 = arith.constant 0 : i32
    return %arg0, %c0_i32 : i32, i32
  }
}

</mosaic_0001>

<llo_original>
// kernel: tpu_custom_call.1
$region0: #{tpu_custom_call.1}
  #allocation0 [shape = 'u32[]', space=smem, size = 0x4, offset = 0x4, fixed_abs, tag = 'smem constant byte address 0x4 - core index']
  #allocation1 [shape = 'u32[72,128]{1,0:T(1,128)}', space=vmem, size = 0x9000, scoped, tag = 'internal scratch']
  %s0 = inlined_call_operand.hbm [shape: bf16[16,16], index: 0, kind: input, shape index: {}]
  %s1 = inlined_call_operand.hbm [shape: bf16[16,512], index: 1, kind: input, shape index: {}]
  %s2 = inlined_call_operand.vmem [shape: f32[1,512], index: 2, kind: input, shape index: {}]
  %s3 = inlined_call_operand.hbm [shape: bf16[512,256], index: 3, kind: input, shape index: {}]
  %s4 = inlined_call_operand.hbm [shape: f32[1,256], index: 4, kind: input, shape index: {}]
  %s5 = inlined_call_operand.vmem [shape: bf16[256,128], index: 5, kind: input, shape index: {}]
  %s6 = inlined_call_operand.vmem [shape: f32[1,128], index: 6, kind: input, shape index: {}]
  %s7 = inlined_call_operand.vmem [shape: bf16[128,64], index: 7, kind: input, shape index: {}]
  %s8 = inlined_call_operand.vmem [shape: f32[1,64], index: 8, kind: input, shape index: {}]
  %s9 = inlined_call_operand.vmem [shape: bf16[64,2], index: 9, kind: input, shape index: {}]
  %s10 = inlined_call_operand.vmem [shape: f32[1,2], index: 10, kind: input, shape index: {}]
  %s11 = inlined_call_operand.vmem [shape: f32[16,2], index: 11, kind: output, shape index: {}]
  %s12 = sld [smem:[#allocation0]]
  $region70: #{tpu_custom_call.1} parent=0
    _
  %s14 = ssub.s32 1, %s12
  %s15 = scalar_select 0, %s14, %s12
  $region1: #{tpu_custom_call.1} parent=0
    #allocation2 [shape = 'u8[4096]{0}', space=vmem, size = 0x1000, scoped, tag = 'input window, operand 0, single buffered']
    #allocation3 [shape = 's32[1]{0}', space=sflag, size = 0x4, scoped, tag = 'scoped memory for tpu_custom_call.1']
    #allocation4 [shape = 'u8[16384]{0}', space=vmem, size = 0x4000, scoped, tag = 'input window, operand 1, single buffered']
    #allocation5 [shape = 's32[1]{0}', space=sflag, size = 0x4, scoped, tag = 'scoped memory for tpu_custom_call.1']
    #allocation6 [shape = 'u8[262144]{0}', space=vmem, size = 0x40000, scoped, tag = 'input window, operand 3, single buffered']
    #allocation7 [shape = 'u8[1024]{0}', space=vmem, size = 0x400, scoped, tag = 'input window, operand 4, single buffered']
    #allocation8 [shape = 's32[1]{0}', space=sflag, size = 0x4, scoped, tag = 'scoped memory for tpu_custom_call.1']
    %16 = vsyncpa [#allocation3], 0
    %17 = vsyncpa [#allocation5], 0
    %18 = vsyncpa [#allocation8], 0
    // Predicated region
    $region2: #{tpu_custom_call.1} parent=1 // pred_check
      _
    $region3: #{tpu_custom_call.1} parent=1 // pred_check_branch
      %20 = sbr.rel (0) target = $region5
    $region4: #{tpu_custom_call.1} parent=1 // pred_region
      %22 = vsyncadd [#allocation3], 0
      %s23 = sshll.u32 %s0, 4
      %s24 = int_to_ptr.hbm [resolvable:$true] %s23
      %s25 = sshll.u32 [#allocation2], 4
      %s26 = int_to_ptr.vmem [resolvable:$true] %s25
      %31 = dma.hbm_to_vmem [thread:$0]  %s24, 128, %s26, [#allocation3], 64, 64, 4
    $region5: #{tpu_custom_call.1} parent=1 // pred_fallthru
      _
    // Predicated region
    $region6: #{tpu_custom_call.1} parent=1 // pred_check
      _
    $region7: #{tpu_custom_call.1} parent=1 // pred_check_branch
      %33 = sbr.rel (0) target = $region9
    $region8: #{tpu_custom_call.1} parent=1 // pred_region
      %35 = vsyncadd [#allocation5], 0
      %s36 = sshll.u32 %s1, 4
      %s37 = int_to_ptr.hbm [resolvable:$true] %s36
      %s38 = sshll.u32 [#allocation4], 4
      %s39 = int_to_ptr.vmem [resolvable:$true] %s38
      %44 = dma.hbm_to_vmem [thread:$0]  %s37, 512, %s39, [#allocation5], 256, 256, 16
    $region9: #{tpu_custom_call.1} parent=1 // pred_fallthru
      _
    // Predicated region
    $region10: #{tpu_custom_call.1} parent=1 // pred_check
      _
    $region11: #{tpu_custom_call.1} parent=1 // pred_check_branch
      %46 = sbr.rel (0) target = $region13
    $region12: #{tpu_custom_call.1} parent=1 // pred_region
      _
    $region13: #{tpu_custom_call.1} parent=1 // pred_fallthru
      _
    // Predicated region
    $region14: #{tpu_custom_call.1} parent=1 // pred_check
      _
    $region15: #{tpu_custom_call.1} parent=1 // pred_check_branch
      %48 = sbr.rel (0) target = $region17
    $region16: #{tpu_custom_call.1} parent=1 // pred_region
      %50 = vsyncadd [#allocation5], 0
      %s51 = sshll.u32 %s3, 4
      %s52 = int_to_ptr.hbm [resolvable:$true] %s51
      %s53 = sshll.u32 [#allocation6], 4
      %s54 = int_to_ptr.vmem [resolvable:$true] %s53
      %59 = dma.hbm_to_vmem [thread:$0]  %s52, 8192, %s54, [#allocation5], 128, 128, 8
    $region17: #{tpu_custom_call.1} parent=1 // pred_fallthru
      _
    // Predicated region
    $region18: #{tpu_custom_call.1} parent=1 // pred_check
      _
    $region19: #{tpu_custom_call.1} parent=1 // pred_check_branch
      %61 = sbr.rel (0) target = $region21
    $region20: #{tpu_custom_call.1} parent=1 // pred_region
      %63 = vsyncadd [#allocation8], 0
      %s65 = sshll.u32 %s4, 4
      %s66 = int_to_ptr.hbm [resolvable:$true] %s65
      %s67 = sshll.u32 [#allocation7], 4
      %s68 = int_to_ptr.vmem [resolvable:$true] %s67
      %70 = dma.hbm_to_vmem [thread:$0]  %s66, 32, %s68, [#allocation8]
    $region21: #{tpu_custom_call.1} parent=1 // pred_fallthru
      _
    // Predicated region
    $region22: #{tpu_custom_call.1} parent=1 // pred_check
      _
    $region23: #{tpu_custom_call.1} parent=1 // pred_check_branch
      %72 = sbr.rel (0) target = $region25
    $region24: #{tpu_custom_call.1} parent=1 // pred_region
      _
    $region25: #{tpu_custom_call.1} parent=1 // pred_fallthru
      _
    // Predicated region
    $region26: #{tpu_custom_call.1} parent=1 // pred_check
      _
    $region27: #{tpu_custom_call.1} parent=1 // pred_check_branch
      %74 = sbr.rel (0) target = $region29
    $region28: #{tpu_custom_call.1} parent=1 // pred_region
      _
    $region29: #{tpu_custom_call.1} parent=1 // pred_fallthru
      _
    // Predicated region
    $region30: #{tpu_custom_call.1} parent=1 // pred_check
      _
    $region31: #{tpu_custom_call.1} parent=1 // pred_check_branch
      %76 = sbr.rel (0) target = $region33
    $region32: #{tpu_custom_call.1} parent=1 // pred_region
      _
    $region33: #{tpu_custom_call.1} parent=1 // pred_fallthru
      _
    // Predicated region
    $region34: #{tpu_custom_call.1} parent=1 // pred_check
      _
    $region35: #{tpu_custom_call.1} parent=1 // pred_check_branch
      %78 = sbr.rel (0) target = $region37
    $region36: #{tpu_custom_call.1} parent=1 // pred_region
      _
    $region37: #{tpu_custom_call.1} parent=1 // pred_fallthru
      _
    // Predicated region
    $region38: #{tpu_custom_call.1} parent=1 // pred_check
      _
    $region39: #{tpu_custom_call.1} parent=1 // pred_check_branch
      %80 = sbr.rel (0) target = $region41
    $region40: #{tpu_custom_call.1} parent=1 // pred_region
      _
    $region41: #{tpu_custom_call.1} parent=1 // pred_fallthru
      _
    // Predicated region
    $region42: #{tpu_custom_call.1} parent=1 // pred_check
      _
    $region43: #{tpu_custom_call.1} parent=1 // pred_check_branch
      %82 = sbr.rel (0) target = $region45
    $region44: #{tpu_custom_call.1} parent=1 // pred_region
      _
    $region45: #{tpu_custom_call.1} parent=1 // pred_fallthru
      _
    // Predicated region
    $region46: #{tpu_custom_call.1} parent=1 // pred_check
      _
    $region47: #{tpu_custom_call.1} parent=1 // pred_check_branch
      %84 = sbr.rel (0) target = $region49
    $region48: #{tpu_custom_call.1} parent=1 // pred_region
      %86 = dma.done [#allocation3], 128
    $region49: #{tpu_custom_call.1} parent=1 // pred_fallthru
      _
    // Predicated region
    $region50: #{tpu_custom_call.1} parent=1 // pred_check
      _
    $region51: #{tpu_custom_call.1} parent=1 // pred_check_branch
      %88 = sbr.rel (0) target = $region53
    $region52: #{tpu_custom_call.1} parent=1 // pred_region
      %90 = dma.done [#allocation5], 512
    $region53: #{tpu_custom_call.1} parent=1 // pred_fallthru
      _
    // Predicated region
    $region54: #{tpu_custom_call.1} parent=1 // pred_check
      _
    $region55: #{tpu_custom_call.1} parent=1 // pred_check_branch
      %92 = sbr.rel (0) target = $region57
    $region56: #{tpu_custom_call.1} parent=1 // pred_region
      %94 = dma.done [#allocation5], 8192
    $region57: #{tpu_custom_call.1} parent=1 // pred_fallthru
      _
    // Predicated region
    $region58: #{tpu_custom_call.1} parent=1 // pred_check
      _
    $region59: #{tpu_custom_call.1} parent=1 // pred_check_branch
      %96 = sbr.rel (0) target = $region61
    $region60: #{tpu_custom_call.1} parent=1 // pred_region
      %98 = dma.done [#allocation8], 32
    $region61: #{tpu_custom_call.1} parent=1 // pred_fallthru
      _
    %v100 = vld [vmem:[#allocation2] sm:$0xf]
    %v101 = vld [vmem:[#allocation2 + $0x4] sm:$0xf]
    %v102 = vld [vmem:[#allocation4] sm:$0xff]
    %v103 = vld [vmem:[#allocation4 + $0x8] sm:$0xff]
    %v104 = vld [vmem:[#allocation4 + $0x10] sm:$0xff]
    %v105 = vld [vmem:[#allocation4 + $0x18] sm:$0xff]
    %v106 = vld [vmem:[%s2] sm:$0xf]
    %v108 = vperm.slane %v106, 0
    %v109 = vperm.slane %v106, 1
    %v110 = vperm.slane %v106, 2
    %v111 = vperm.slane %v106, 3
    %v118 = vunpack.c.l.b16 %v100
    %v119 = vunpack.c.l.b16 %v101
    %v120 = vpack.c.b16 %v119, %v118
    %v125 = vunpack.c.l.b16 %v102
    %v126 = vunpack.c.h.b16 %v102
    %v127 = vunpack.c.l.b16 %v103
    %v128 = vunpack.c.h.b16 %v103
    %v129 = vunpack.c.l.b16 %v104
    %v130 = vunpack.c.h.b16 %v104
    %v131 = vunpack.c.l.b16 %v105
    %v132 = vunpack.c.h.b16 %v105
    %v133 = vpack.c.b16 %v129, %v125
    %v134 = vpack.c.b16 %v130, %v126
    %v135 = vpack.c.b16 %v131, %v127
    %v136 = vpack.c.b16 %v132, %v128
    %vm141 = vcmask 130048
    %v143 = vsel %vm141, %v120, 0
    %145 = vmatpush.bf16.msra.mxu0 0
    %146 = vmatpush.bf16.msra.mxu0 0
    %147 = vmatpush.bf16.msra.mxu0 0
    %148 = vmatpush.bf16.msra.mxu0 0
    %149 = vmatpush.bf16.msra.mxu0 0
    %150 = vmatpush.bf16.msra.mxu0 0
    %151 = vmatpush.bf16.msra.mxu0 0
    %152 = vmatpush.bf16.msra.mxu0 %v133
    %153 = vmatmul.bf16.gmra.mxu0 %v143
    %v154 = vpop.f32.mrf.mxu0
    %v155 = vadd.f32 %v108, %v154
    %v156 = vpop.f32.mrf.mxu0
    %v157 = vadd.f32 %v108, %v156
    %158 = vdwg.mxu0
    %159 = vmatpush.bf16.msra.mxu0 0
    %160 = vmatpush.bf16.msra.mxu0 0
    %161 = vmatpush.bf16.msra.mxu0 0
    %162 = vmatpush.bf16.msra.mxu0 0
    %163 = vmatpush.bf16.msra.mxu0 0
    %164 = vmatpush.bf16.msra.mxu0 0
    %165 = vmatpush.bf16.msra.mxu0 0
    %166 = vmatpush.bf16.msra.mxu0 %v134
    %167 = vmatmul.bf16.gmra.mxu0 %v143
    %v168 = vpop.f32.mrf.mxu0
    %v169 = vadd.f32 %v109, %v168
    %v170 = vpop.f32.mrf.mxu0
    %v171 = vadd.f32 %v109, %v170
    %172 = vdwg.mxu0
    %173 = vmatpush.bf16.msra.mxu0 0
    %174 = vmatpush.bf16.msra.mxu0 0
    %175 = vmatpush.bf16.msra.mxu0 0
    %176 = vmatpush.bf16.msra.mxu0 0
    %177 = vmatpush.bf16.msra.mxu0 0
    %178 = vmatpush.bf16.msra.mxu0 0
    %179 = vmatpush.bf16.msra.mxu0 0
    %180 = vmatpush.bf16.msra.mxu0 %v135
    %181 = vmatmul.bf16.gmra.mxu0 %v143
    %v182 = vpop.f32.mrf.mxu0
    %v183 = vadd.f32 %v110, %v182
    %v184 = vpop.f32.mrf.mxu0
    %v185 = vadd.f32 %v110, %v184
    %186 = vdwg.mxu0
    %187 = vmatpush.bf16.msra.mxu0 0
    %188 = vmatpush.bf16.msra.mxu0 0
    %189 = vmatpush.bf16.msra.mxu0 0
    %190 = vmatpush.bf16.msra.mxu0 0
    %191 = vmatpush.bf16.msra.mxu0 0
    %192 = vmatpush.bf16.msra.mxu0 0
    %193 = vmatpush.bf16.msra.mxu0 0
    %194 = vmatpush.bf16.msra.mxu0 %v136
    %195 = vmatmul.bf16.gmra.mxu0 %v143
    %v196 = vpop.f32.mrf.mxu0
    %v197 = vadd.f32 %v111, %v196
    %v198 = vpop.f32.mrf.mxu0
    %v199 = vadd.f32 %v111, %v198
    %200 = vdwg.mxu0
    %v201 = vmax.f32 %v155, 0.0
    %v202 = vmax.f32 %v169, 0.0
    %v203 = vmax.f32 %v183, 0.0
    %v204 = vmax.f32 %v197, 0.0
    %v205 = vmax.f32 %v157, 0.0
    %v206 = vmax.f32 %v171, 0.0
    %v207 = vmax.f32 %v185, 0.0
    %v208 = vmax.f32 %v199, 0.0
    %v209 = vpack.c.bf16 %v205, %v201
    %v210 = vpack.c.bf16 %v206, %v202
    %v211 = vpack.c.bf16 %v207, %v203
    %v212 = vpack.c.bf16 %v208, %v204
    %v213 = vld [vmem:[#allocation6] sm:$0xff]
    %v214 = vld [vmem:[#allocation6 + $0x8] sm:$0xff]
    %v215 = vld [vmem:[#allocation6 + $0x10] sm:$0xff]
    %v216 = vld [vmem:[#allocation6 + $0x18] sm:$0xff]
    %v217 = vld [vmem:[#allocation6 + $0x20] sm:$0xff]
    %v218 = vld [vmem:[#allocation6 + $0x28] sm:$0xff]
    %v219 = vld [vmem:[#allocation6 + $0x30] sm:$0xff]
    %v220 = vld [vmem:[#allocation6 + $0x38] sm:$0xff]
    %v221 = vld [vmem:[#allocation6 + $0x40] sm:$0xff]
    %v222 = vld [vmem:[#allocation6 + $0x48] sm:$0xff]
    %v223 = vld [vmem:[#allocation6 + $0x50] sm:$0xff]
    %v224 = vld [vmem:[#allocation6 + $0x58] sm:$0xff]
    %v225 = vld [vmem:[#allocation6 + $0x60] sm:$0xff]
    %v226 = vld [vmem:[#allocation6 + $0x68] sm:$0xff]
    %v227 = vld [vmem:[#allocation6 + $0x70] sm:$0xff]
    %v228 = vld [vmem:[#allocation6 + $0x78] sm:$0xff]
    %v229 = vld [vmem:[#allocation6 + $0x80] sm:$0xff]
    %v230 = vld [vmem:[#allocation6 + $0x88] sm:$0xff]
    %v231 = vld [vmem:[#allocation6 + $0x90] sm:$0xff]
    %v232 = vld [vmem:[#allocation6 + $0x98] sm:$0xff]
    %v233 = vld [vmem:[#allocation6 + $0xa0] sm:$0xff]
    %v234 = vld [vmem:[#allocation6 + $0xa8] sm:$0xff]
    %v235 = vld [vmem:[#allocation6 + $0xb0] sm:$0xff]
    %v236 = vld [vmem:[#allocation6 + $0xb8] sm:$0xff]
    %v237 = vld [vmem:[#allocation6 + $0xc0] sm:$0xff]
    %v238 = vld [vmem:[#allocation6 + $0xc8] sm:$0xff]
    %v239 = vld [vmem:[#allocation6 + $0xd0] sm:$0xff]
    %v240 = vld [vmem:[#allocation6 + $0xd8] sm:$0xff]
    %v241 = vld [vmem:[#allocation6 + $0xe0] sm:$0xff]
    %v242 = vld [vmem:[#allocation6 + $0xe8] sm:$0xff]
    %v243 = vld [vmem:[#allocation6 + $0xf0] sm:$0xff]
    %v244 = vld [vmem:[#allocation6 + $0xf8] sm:$0xff]
    %v245 = vld [vmem:[#allocation6 + $0x100] sm:$0xff]
    %v246 = vld [vmem:[#allocation6 + $0x108] sm:$0xff]
    %v247 = vld [vmem:[#allocation6 + $0x110] sm:$0xff]
    %v248 = vld [vmem:[#allocation6 + $0x118] sm:$0xff]
    %v249 = vld [vmem:[#allocation6 + $0x120] sm:$0xff]
    %v250 = vld [vmem:[#allocation6 + $0x128] sm:$0xff]
    %v251 = vld [vmem:[#allocation6 + $0x130] sm:$0xff]
    %v252 = vld [vmem:[#allocation6 + $0x138] sm:$0xff]
    %v253 = vld [vmem:[#allocation6 + $0x140] sm:$0xff]
    %v254 = vld [vmem:[#allocation6 + $0x148] sm:$0xff]
    %v255 = vld [vmem:[#allocation6 + $0x150] sm:$0xff]
    %v256 = vld [vmem:[#allocation6 + $0x158] sm:$0xff]
    %v257 = vld [vmem:[#allocation6 + $0x160] sm:$0xff]
    %v258 = vld [vmem:[#allocation6 + $0x168] sm:$0xff]
    %v259 = vld [vmem:[#allocation6 + $0x170] sm:$0xff]
    %v260 = vld [vmem:[#allocation6 + $0x178] sm:$0xff]
    %v261 = vld [vmem:[#allocation6 + $0x180] sm:$0xff]
    %v262 = vld [vmem:[#allocation6 + $0x188] sm:$0xff]
    %v263 = vld [vmem:[#allocation6 + $0x190] sm:$0xff]
    %v264 = vld [vmem:[#allocation6 + $0x198] sm:$0xff]
    %v265 = vld [vmem:[#allocation6 + $0x1a0] sm:$0xff]
    %v266 = vld [vmem:[#allocation6 + $0x1a8] sm:$0xff]
    %v267 = vld [vmem:[#allocation6 + $0x1b0] sm:$0xff]
    %v268 = vld [vmem:[#allocation6 + $0x1b8] sm:$0xff]
    %v269 = vld [vmem:[#allocation6 + $0x1c0] sm:$0xff]
    %v270 = vld [vmem:[#allocation6 + $0x1c8] sm:$0xff]
    %v271 = vld [vmem:[#allocation6 + $0x1d0] sm:$0xff]
    %v272 = vld [vmem:[#allocation6 + $0x1d8] sm:$0xff]
    %v273 = vld [vmem:[#allocation6 + $0x1e0] sm:$0xff]
    %v274 = vld [vmem:[#allocation6 + $0x1e8] sm:$0xff]
    %v275 = vld [vmem:[#allocation6 + $0x1f0] sm:$0xff]
    %v276 = vld [vmem:[#allocation6 + $0x1f8] sm:$0xff]
    %v277 = vld [vmem:[#allocation7] sm:$0x3]
    %v279 = vperm.slane %v277, 0
    %v280 = vperm.slane %v277, 1
    %v347 = vunpack.c.l.b16 %v213
    %v348 = vunpack.c.h.b16 %v213
    %v349 = vunpack.c.l.b16 %v214
    %v350 = vunpack.c.h.b16 %v214
    %v351 = vunpack.c.l.b16 %v215
    %v352 = vunpack.c.h.b16 %v215
    %v353 = vunpack.c.l.b16 %v216
    %v354 = vunpack.c.h.b16 %v216
    %v355 = vunpack.c.l.b16 %v217
    %v356 = vunpack.c.h.b16 %v217
    %v357 = vunpack.c.l.b16 %v218
    %v358 = vunpack.c.h.b16 %v218
    %v359 = vunpack.c.l.b16 %v219
    %v360 = vunpack.c.h.b16 %v219
    %v361 = vunpack.c.l.b16 %v220
    %v362 = vunpack.c.h.b16 %v220
    %v363 = vunpack.c.l.b16 %v221
    %v364 = vunpack.c.h.b16 %v221
    %v365 = vunpack.c.l.b16 %v222
    %v366 = vunpack.c.h.b16 %v222
    %v367 = vunpack.c.l.b16 %v223
    %v368 = vunpack.c.h.b16 %v223
    %v369 = vunpack.c.l.b16 %v224
    %v370 = vunpack.c.h.b16 %v224
    %v371 = vunpack.c.l.b16 %v225
    %v372 = vunpack.c.h.b16 %v225
    %v373 = vunpack.c.l.b16 %v226
    %v374 = vunpack.c.h.b16 %v226
    %v375 = vunpack.c.l.b16 %v227
    %v376 = vunpack.c.h.b16 %v227
    %v377 = vunpack.c.l.b16 %v228
    %v378 = vunpack.c.h.b16 %v228
    %v379 = vunpack.c.l.b16 %v229
    %v380 = vunpack.c.h.b16 %v229
    %v381 = vunpack.c.l.b16 %v230
    %v382 = vunpack.c.h.b16 %v230
    %v383 = vunpack.c.l.b16 %v231
    %v384 = vunpack.c.h.b16 %v231
    %v385 = vunpack.c.l.b16 %v232
    %v386 = vunpack.c.h.b16 %v232
    %v387 = vunpack.c.l.b16 %v233
    %v388 = vunpack.c.h.b16 %v233
    %v389 = vunpack.c.l.b16 %v234
    %v390 = vunpack.c.h.b16 %v234
    %v391 = vunpack.c.l.b16 %v235
    %v392 = vunpack.c.h.b16 %v235
    %v393 = vunpack.c.l.b16 %v236
    %v394 = vunpack.c.h.b16 %v236
    %v395 = vunpack.c.l.b16 %v237
    %v396 = vunpack.c.h.b16 %v237
    %v397 = vunpack.c.l.b16 %v238
    %v398 = vunpack.c.h.b16 %v238
    %v399 = vunpack.c.l.b16 %v239
    %v400 = vunpack.c.h.b16 %v239
    %v401 = vunpack.c.l.b16 %v240
    %v402 = vunpack.c.h.b16 %v240
    %v403 = vunpack.c.l.b16 %v241
    %v404 = vunpack.c.h.b16 %v241
    %v405 = vunpack.c.l.b16 %v242
    %v406 = vunpack.c.h.b16 %v242
    %v407 = vunpack.c.l.b16 %v243
    %v408 = vunpack.c.h.b16 %v243
    %v409 = vunpack.c.l.b16 %v244
    %v410 = vunpack.c.h.b16 %v244
    %v411 = vunpack.c.l.b16 %v245
    %v412 = vunpack.c.h.b16 %v245
    %v413 = vunpack.c.l.b16 %v246
    %v414 = vunpack.c.h.b16 %v246
    %v415 = vunpack.c.l.b16 %v247
    %v416 = vunpack.c.h.b16 %v247
    %v417 = vunpack.c.l.b16 %v248
    %v418 = vunpack.c.h.b16 %v248
    %v419 = vunpack.c.l.b16 %v249
    %v420 = vunpack.c.h.b16 %v249
    %v421 = vunpack.c.l.b16 %v250
    %v422 = vunpack.c.h.b16 %v250
    %v423 = vunpack.c.l.b16 %v251
    %v424 = vunpack.c.h.b16 %v251
    %v425 = vunpack.c.l.b16 %v252
    %v426 = vunpack.c.h.b16 %v252
    %v427 = vunpack.c.l.b16 %v253
    %v428 = vunpack.c.h.b16 %v253
    %v429 = vunpack.c.l.b16 %v254
    %v430 = vunpack.c.h.b16 %v254
    %v431 = vunpack.c.l.b16 %v255
    %v432 = vunpack.c.h.b16 %v255
    %v433 = vunpack.c.l.b16 %v256
    %v434 = vunpack.c.h.b16 %v256
    %v435 = vunpack.c.l.b16 %v257
    %v436 = vunpack.c.h.b16 %v257
    %v437 = vunpack.c.l.b16 %v258
    %v438 = vunpack.c.h.b16 %v258
    %v439 = vunpack.c.l.b16 %v259
    %v440 = vunpack.c.h.b16 %v259
    %v441 = vunpack.c.l.b16 %v260
    %v442 = vunpack.c.h.b16 %v260
    %v443 = vunpack.c.l.b16 %v261
    %v444 = vunpack.c.h.b16 %v261
    %v445 = vunpack.c.l.b16 %v262
    %v446 = vunpack.c.h.b16 %v262
    %v447 = vunpack.c.l.b16 %v263
    %v448 = vunpack.c.h.b16 %v263
    %v449 = vunpack.c.l.b16 %v264
    %v450 = vunpack.c.h.b16 %v264
    %v451 = vunpack.c.l.b16 %v265
    %v452 = vunpack.c.h.b16 %v265
    %v453 = vunpack.c.l.b16 %v266
    %v454 = vunpack.c.h.b16 %v266
    %v455 = vunpack.c.l.b16 %v267
    %v456 = vunpack.c.h.b16 %v267
    %v457 = vunpack.c.l.b16 %v268
    %v458 = vunpack.c.h.b16 %v268
    %v459 = vunpack.c.l.b16 %v269
    %v460 = vunpack.c.h.b16 %v269
    %v461 = vunpack.c.l.b16 %v270
    %v462 = vunpack.c.h.b16 %v270
    %v463 = vunpack.c.l.b16 %v271
    %v464 = vunpack.c.h.b16 %v271
    %v465 = vunpack.c.l.b16 %v272
    %v466 = vunpack.c.h.b16 %v272
    %v467 = vunpack.c.l.b16 %v273
    %v468 = vunpack.c.h.b16 %v273
    %v469 = vunpack.c.l.b16 %v274
    %v470 = vunpack.c.h.b16 %v274
    %v471 = vunpack.c.l.b16 %v275
    %v472 = vunpack.c.h.b16 %v275
    %v473 = vunpack.c.l.b16 %v276
    %v474 = vunpack.c.h.b16 %v276
    %v475 = vpack.c.b16 %v349, %v347
    %v476 = vpack.c.b16 %v350, %v348
    %v477 = vpack.c.b16 %v353, %v351
    %v478 = vpack.c.b16 %v354, %v352
    %v479 = vpack.c.b16 %v357, %v355
    %v480 = vpack.c.b16 %v358, %v356
    %v481 = vpack.c.b16 %v361, %v359
    %v482 = vpack.c.b16 %v362, %v360
    %v483 = vpack.c.b16 %v365, %v363
    %v484 = vpack.c.b16 %v366, %v364
    %v485 = vpack.c.b16 %v369, %v367
    %v486 = vpack.c.b16 %v370, %v368
    %v487 = vpack.c.b16 %v373, %v371
    %v488 = vpack.c.b16 %v374, %v372
    %v489 = vpack.c.b16 %v377, %v375
    %v490 = vpack.c.b16 %v378, %v376
    %v491 = vpack.c.b16 %v381, %v379
    %v492 = vpack.c.b16 %v382, %v380
    %v493 = vpack.c.b16 %v385, %v383
    %v494 = vpack.c.b16 %v386, %v384
    %v495 = vpack.c.b16 %v389, %v387
    %v496 = vpack.c.b16 %v390, %v388
    %v497 = vpack.c.b16 %v393, %v391
    %v498 = vpack.c.b16 %v394, %v392
    %v499 = vpack.c.b16 %v397, %v395
    %v500 = vpack.c.b16 %v398, %v396
    %v501 = vpack.c.b16 %v401, %v399
    %v502 = vpack.c.b16 %v402, %v400
    %v503 = vpack.c.b16 %v405, %v403
    %v504 = vpack.c.b16 %v406, %v404
    %v505 = vpack.c.b16 %v409, %v407
    %v506 = vpack.c.b16 %v410, %v408
    %v507 = vpack.c.b16 %v413, %v411
    %v508 = vpack.c.b16 %v414, %v412
    %v509 = vpack.c.b16 %v417, %v415
    %v510 = vpack.c.b16 %v418, %v416
    %v511 = vpack.c.b16 %v421, %v419
    %v512 = vpack.c.b16 %v422, %v420
    %v513 = vpack.c.b16 %v425, %v423
    %v514 = vpack.c.b16 %v426, %v424
    %v515 = vpack.c.b16 %v429, %v427
    %v516 = vpack.c.b16 %v430, %v428
    %v517 = vpack.c.b16 %v433, %v431
    %v518 = vpack.c.b16 %v434, %v432
    %v519 = vpack.c.b16 %v437, %v435
    %v520 = vpack.c.b16 %v438, %v436
    %v521 = vpack.c.b16 %v441, %v439
    %v522 = vpack.c.b16 %v442, %v440
    %v523 = vpack.c.b16 %v445, %v443
    %v524 = vpack.c.b16 %v446, %v444
    %v525 = vpack.c.b16 %v449, %v447
    %v526 = vpack.c.b16 %v450, %v448
    %v527 = vpack.c.b16 %v453, %v451
    %v528 = vpack.c.b16 %v454, %v452
    %v529 = vpack.c.b16 %v457, %v455
    %v530 = vpack.c.b16 %v458, %v456
    %v531 = vpack.c.b16 %v461, %v459
    %v532 = vpack.c.b16 %v462, %v460
    %v533 = vpack.c.b16 %v465, %v463
    %v534 = vpack.c.b16 %v466, %v464
    %v535 = vpack.c.b16 %v469, %v467
    %v536 = vpack.c.b16 %v470, %v468
    %v537 = vpack.c.b16 %v473, %v471
    %v538 = vpack.c.b16 %v474, %v472
    %603 = vmatpush.bf16.msra.mxu0 %v489
    %604 = vmatpush.bf16.msra.mxu0 %v487
    %605 = vmatpush.bf16.msra.mxu0 %v485
    %606 = vmatpush.bf16.msra.mxu0 %v483
    %607 = vmatpush.bf16.msra.mxu0 %v481
    %608 = vmatpush.bf16.msra.mxu0 %v479
    %609 = vmatpush.bf16.msra.mxu0 %v477
    %610 = vmatpush.bf16.msra.mxu0 %v475
    %611 = vmatmul.bf16.gmra.mxu0 %v209
    %v612 = vpop.f32.mrf.mxu0
    %v613 = vadd.f32 %v279, %v612
    %v614 = vpop.f32.mrf.mxu0
    %v615 = vadd.f32 %v279, %v614
    %616 = vdwg.mxu0
    %617 = vmatpush.bf16.msra.mxu0 %v505
    %618 = vmatpush.bf16.msra.mxu0 %v503
    %619 = vmatpush.bf16.msra.mxu0 %v501
    %620 = vmatpush.bf16.msra.mxu0 %v499
    %621 = vmatpush.bf16.msra.mxu0 %v497
    %622 = vmatpush.bf16.msra.mxu0 %v495
    %623 = vmatpush.bf16.msra.mxu0 %v493
    %624 = vmatpush.bf16.msra.mxu0 %v491
    %625 = vmatmul.bf16.gmra.mxu0 %v210
    %v626 = vpop.f32.mrf.mxu0
    %v627 = vadd.f32 %v613, %v626
    %v628 = vpop.f32.mrf.mxu0
    %v629 = vadd.f32 %v615, %v628
    %630 = vdwg.mxu0
    %631 = vmatpush.bf16.msra.mxu0 %v521
    %632 = vmatpush.bf16.msra.mxu0 %v519
    %633 = vmatpush.bf16.msra.mxu0 %v517
    %634 = vmatpush.bf16.msra.mxu0 %v515
    %635 = vmatpush.bf16.msra.mxu0 %v513
    %636 = vmatpush.bf16.msra.mxu0 %v511
    %637 = vmatpush.bf16.msra.mxu0 %v509
    %638 = vmatpush.bf16.msra.mxu0 %v507
    %639 = vmatmul.bf16.gmra.mxu0 %v211
    %v640 = vpop.f32.mrf.mxu0
    %v641 = vadd.f32 %v627, %v640
    %v642 = vpop.f32.mrf.mxu0
    %v643 = vadd.f32 %v629, %v642
    %644 = vdwg.mxu0
    %645 = vmatpush.bf16.msra.mxu0 %v537
    %646 = vmatpush.bf16.msra.mxu0 %v535
    %647 = vmatpush.bf16.msra.mxu0 %v533
    %648 = vmatpush.bf16.msra.mxu0 %v531
    %649 = vmatpush.bf16.msra.mxu0 %v529
    %650 = vmatpush.bf16.msra.mxu0 %v527
    %651 = vmatpush.bf16.msra.mxu0 %v525
    %652 = vmatpush.bf16.msra.mxu0 %v523
    %653 = vmatmul.bf16.gmra.mxu0 %v212
    %v654 = vpop.f32.mrf.mxu0
    %v655 = vadd.f32 %v641, %v654
    %v656 = vpop.f32.mrf.mxu0
    %v657 = vadd.f32 %v643, %v656
    %658 = vdwg.mxu0
    %659 = vmatpush.bf16.msra.mxu0 %v490
    %660 = vmatpush.bf16.msra.mxu0 %v488
    %661 = vmatpush.bf16.msra.mxu0 %v486
    %662 = vmatpush.bf16.msra.mxu0 %v484
    %663 = vmatpush.bf16.msra.mxu0 %v482
    %664 = vmatpush.bf16.msra.mxu0 %v480
    %665 = vmatpush.bf16.msra.mxu0 %v478
    %666 = vmatpush.bf16.msra.mxu0 %v476
    %667 = vmatmul.bf16.gmra.mxu0 %v209
    %v668 = vpop.f32.mrf.mxu0
    %v669 = vadd.f32 %v280, %v668
    %v670 = vpop.f32.mrf.mxu0
    %v671 = vadd.f32 %v280, %v670
    %672 = vdwg.mxu0
    %673 = vmatpush.bf16.msra.mxu0 %v506
    %674 = vmatpush.bf16.msra.mxu0 %v504
    %675 = vmatpush.bf16.msra.mxu0 %v502
    %676 = vmatpush.bf16.msra.mxu0 %v500
    %677 = vmatpush.bf16.msra.mxu0 %v498
    %678 = vmatpush.bf16.msra.mxu0 %v496
    %679 = vmatpush.bf16.msra.mxu0 %v494
    %680 = vmatpush.bf16.msra.mxu0 %v492
    %681 = vmatmul.bf16.gmra.mxu0 %v210
    %v682 = vpop.f32.mrf.mxu0
    %v683 = vadd.f32 %v669, %v682
    %v684 = vpop.f32.mrf.mxu0
    %v685 = vadd.f32 %v671, %v684
    %686 = vdwg.mxu0
    %687 = vmatpush.bf16.msra.mxu0 %v522
    %688 = vmatpush.bf16.msra.mxu0 %v520
    %689 = vmatpush.bf16.msra.mxu0 %v518
    %690 = vmatpush.bf16.msra.mxu0 %v516
    %691 = vmatpush.bf16.msra.mxu0 %v514
    %692 = vmatpush.bf16.msra.mxu0 %v512
    %693 = vmatpush.bf16.msra.mxu0 %v510
    %694 = vmatpush.bf16.msra.mxu0 %v508
    %695 = vmatmul.bf16.gmra.mxu0 %v211
    %v696 = vpop.f32.mrf.mxu0
    %v697 = vadd.f32 %v683, %v696
    %v698 = vpop.f32.mrf.mxu0
    %v699 = vadd.f32 %v685, %v698
    %700 = vdwg.mxu0
    %701 = vmatpush.bf16.msra.mxu0 %v538
    %702 = vmatpush.bf16.msra.mxu0 %v536
    %703 = vmatpush.bf16.msra.mxu0 %v534
    %704 = vmatpush.bf16.msra.mxu0 %v532
    %705 = vmatpush.bf16.msra.mxu0 %v530
    %706 = vmatpush.bf16.msra.mxu0 %v528
    %707 = vmatpush.bf16.msra.mxu0 %v526
    %708 = vmatpush.bf16.msra.mxu0 %v524
    %709 = vmatmul.bf16.gmra.mxu0 %v212
    %v710 = vpop.f32.mrf.mxu0
    %v711 = vadd.f32 %v697, %v710
    %v712 = vpop.f32.mrf.mxu0
    %v713 = vadd.f32 %v699, %v712
    %714 = vdwg.mxu0
    %v715 = vmax.f32 %v655, 0.0
    %v716 = vmax.f32 %v711, 0.0
    %v717 = vmax.f32 %v657, 0.0
    %v718 = vmax.f32 %v713, 0.0
    %v719 = vpack.c.bf16 %v717, %v715
    %v720 = vpack.c.bf16 %v718, %v716
    %v721 = vld [vmem:[%s5] sm:$0xf]
    %v722 = vld [vmem:[%s5 + $0x4] sm:$0xf]
    %v723 = vld [vmem:[%s5 + $0x8] sm:$0xf]
    %v724 = vld [vmem:[%s5 + $0xc] sm:$0xf]
    %v725 = vld [vmem:[%s5 + $0x10] sm:$0xf]
    %v726 = vld [vmem:[%s5 + $0x14] sm:$0xf]
    %v727 = vld [vmem:[%s5 + $0x18] sm:$0xf]
    %v728 = vld [vmem:[%s5 + $0x1c] sm:$0xf]
    %v729 = vld [vmem:[%s5 + $0x20] sm:$0xf]
    %v730 = vld [vmem:[%s5 + $0x24] sm:$0xf]
    %v731 = vld [vmem:[%s5 + $0x28] sm:$0xf]
    %v732 = vld [vmem:[%s5 + $0x2c] sm:$0xf]
    %v733 = vld [vmem:[%s5 + $0x30] sm:$0xf]
    %v734 = vld [vmem:[%s5 + $0x34] sm:$0xf]
    %v735 = vld [vmem:[%s5 + $0x38] sm:$0xf]
    %v736 = vld [vmem:[%s5 + $0x3c] sm:$0xf]
    %v737 = vld [vmem:[%s5 + $0x40] sm:$0xf]
    %v738 = vld [vmem:[%s5 + $0x44] sm:$0xf]
    %v739 = vld [vmem:[%s5 + $0x48] sm:$0xf]
    %v740 = vld [vmem:[%s5 + $0x4c] sm:$0xf]
    %v741 = vld [vmem:[%s5 + $0x50] sm:$0xf]
    %v742 = vld [vmem:[%s5 + $0x54] sm:$0xf]
    %v743 = vld [vmem:[%s5 + $0x58] sm:$0xf]
    %v744 = vld [vmem:[%s5 + $0x5c] sm:$0xf]
    %v745 = vld [vmem:[%s5 + $0x60] sm:$0xf]
    %v746 = vld [vmem:[%s5 + $0x64] sm:$0xf]
    %v747 = vld [vmem:[%s5 + $0x68] sm:$0xf]
    %v748 = vld [vmem:[%s5 + $0x6c] sm:$0xf]
    %v749 = vld [vmem:[%s5 + $0x70] sm:$0xf]
    %v750 = vld [vmem:[%s5 + $0x74] sm:$0xf]
    %v751 = vld [vmem:[%s5 + $0x78] sm:$0xf]
    %v752 = vld [vmem:[%s5 + $0x7c] sm:$0xf]
    %v753 = vld [vmem:[%s6] sm:$0x1]
    %v755 = vperm.slane %v753, 0
    %v789 = vunpack.c.l.b16 %v721
    %v790 = vunpack.c.l.b16 %v722
    %v791 = vunpack.c.l.b16 %v723
    %v792 = vunpack.c.l.b16 %v724
    %v793 = vunpack.c.l.b16 %v725
    %v794 = vunpack.c.l.b16 %v726
    %v795 = vunpack.c.l.b16 %v727
    %v796 = vunpack.c.l.b16 %v728
    %v797 = vunpack.c.l.b16 %v729
    %v798 = vunpack.c.l.b16 %v730
    %v799 = vunpack.c.l.b16 %v731
    %v800 = vunpack.c.l.b16 %v732
    %v801 = vunpack.c.l.b16 %v733
    %v802 = vunpack.c.l.b16 %v734
    %v803 = vunpack.c.l.b16 %v735
    %v804 = vunpack.c.l.b16 %v736
    %v805 = vunpack.c.l.b16 %v737
    %v806 = vunpack.c.l.b16 %v738
    %v807 = vunpack.c.l.b16 %v739
    %v808 = vunpack.c.l.b16 %v740
    %v809 = vunpack.c.l.b16 %v741
    %v810 = vunpack.c.l.b16 %v742
    %v811 = vunpack.c.l.b16 %v743
    %v812 = vunpack.c.l.b16 %v744
    %v813 = vunpack.c.l.b16 %v745
    %v814 = vunpack.c.l.b16 %v746
    %v815 = vunpack.c.l.b16 %v747
    %v816 = vunpack.c.l.b16 %v748
    %v817 = vunpack.c.l.b16 %v749
    %v818 = vunpack.c.l.b16 %v750
    %v819 = vunpack.c.l.b16 %v751
    %v820 = vunpack.c.l.b16 %v752
    %v821 = vpack.c.b16 %v790, %v789
    %v822 = vpack.c.b16 %v792, %v791
    %v823 = vpack.c.b16 %v794, %v793
    %v824 = vpack.c.b16 %v796, %v795
    %v825 = vpack.c.b16 %v798, %v797
    %v826 = vpack.c.b16 %v800, %v799
    %v827 = vpack.c.b16 %v802, %v801
    %v828 = vpack.c.b16 %v804, %v803
    %v829 = vpack.c.b16 %v806, %v805
    %v830 = vpack.c.b16 %v808, %v807
    %v831 = vpack.c.b16 %v810, %v809
    %v832 = vpack.c.b16 %v812, %v811
    %v833 = vpack.c.b16 %v814, %v813
    %v834 = vpack.c.b16 %v816, %v815
    %v835 = vpack.c.b16 %v818, %v817
    %v836 = vpack.c.b16 %v820, %v819
    %853 = vmatpush.bf16.msra.mxu0 %v828
    %854 = vmatpush.bf16.msra.mxu0 %v827
    %855 = vmatpush.bf16.msra.mxu0 %v826
    %856 = vmatpush.bf16.msra.mxu0 %v825
    %857 = vmatpush.bf16.msra.mxu0 %v824
    %858 = vmatpush.bf16.msra.mxu0 %v823
    %859 = vmatpush.bf16.msra.mxu0 %v822
    %860 = vmatpush.bf16.msra.mxu0 %v821
    %861 = vmatmul.bf16.gmra.mxu0 %v719
    %v862 = vpop.f32.mrf.mxu0
    %v863 = vadd.f32 %v755, %v862
    %v864 = vpop.f32.mrf.mxu0
    %v865 = vadd.f32 %v755, %v864
    %866 = vdwg.mxu0
    %867 = vmatpush.bf16.msra.mxu0 %v836
    %868 = vmatpush.bf16.msra.mxu0 %v835
    %869 = vmatpush.bf16.msra.mxu0 %v834
    %870 = vmatpush.bf16.msra.mxu0 %v833
    %871 = vmatpush.bf16.msra.mxu0 %v832
    %872 = vmatpush.bf16.msra.mxu0 %v831
    %873 = vmatpush.bf16.msra.mxu0 %v830
    %874 = vmatpush.bf16.msra.mxu0 %v829
    %875 = vmatmul.bf16.gmra.mxu0 %v720
    %v876 = vpop.f32.mrf.mxu0
    %v877 = vadd.f32 %v863, %v876
    %v878 = vpop.f32.mrf.mxu0
    %v879 = vadd.f32 %v865, %v878
    %880 = vdwg.mxu0
    %v881 = vmax.f32 %v877, 0.0
    %v882 = vmax.f32 %v879, 0.0
    %v883 = vpack.c.bf16 %v882, %v881
    %v884 = vld [vmem:[%s7] sm:$0xf]
    %v885 = vld [vmem:[%s7 + $0x4] sm:$0xf]
    %v886 = vld [vmem:[%s7 + $0x8] sm:$0xf]
    %v887 = vld [vmem:[%s7 + $0xc] sm:$0xf]
    %v888 = vld [vmem:[%s7 + $0x10] sm:$0xf]
    %v889 = vld [vmem:[%s7 + $0x14] sm:$0xf]
    %v890 = vld [vmem:[%s7 + $0x18] sm:$0xf]
    %v891 = vld [vmem:[%s7 + $0x1c] sm:$0xf]
    %v892 = vld [vmem:[%s7 + $0x20] sm:$0xf]
    %v893 = vld [vmem:[%s7 + $0x24] sm:$0xf]
    %v894 = vld [vmem:[%s7 + $0x28] sm:$0xf]
    %v895 = vld [vmem:[%s7 + $0x2c] sm:$0xf]
    %v896 = vld [vmem:[%s7 + $0x30] sm:$0xf]
    %v897 = vld [vmem:[%s7 + $0x34] sm:$0xf]
    %v898 = vld [vmem:[%s7 + $0x38] sm:$0xf]
    %v899 = vld [vmem:[%s7 + $0x3c] sm:$0xf]
    %v900 = vld [vmem:[%s8] sm:$0x1]
    %v902 = vperm.slane %v900, 0
    %v920 = vunpack.c.l.b16 %v884
    %v921 = vunpack.c.l.b16 %v885
    %v922 = vunpack.c.l.b16 %v886
    %v923 = vunpack.c.l.b16 %v887
    %v924 = vunpack.c.l.b16 %v888
    %v925 = vunpack.c.l.b16 %v889
    %v926 = vunpack.c.l.b16 %v890
    %v927 = vunpack.c.l.b16 %v891
    %v928 = vunpack.c.l.b16 %v892
    %v929 = vunpack.c.l.b16 %v893
    %v930 = vunpack.c.l.b16 %v894
    %v931 = vunpack.c.l.b16 %v895
    %v932 = vunpack.c.l.b16 %v896
    %v933 = vunpack.c.l.b16 %v897
    %v934 = vunpack.c.l.b16 %v898
    %v935 = vunpack.c.l.b16 %v899
    %v936 = vpack.c.b16 %v921, %v920
    %v937 = vpack.c.b16 %v923, %v922
    %v938 = vpack.c.b16 %v925, %v924
    %v939 = vpack.c.b16 %v927, %v926
    %v940 = vpack.c.b16 %v929, %v928
    %v941 = vpack.c.b16 %v931, %v930
    %v942 = vpack.c.b16 %v933, %v932
    %v943 = vpack.c.b16 %v935, %v934
    %952 = vmatpush.bf16.msra.mxu0 %v943
    %953 = vmatpush.bf16.msra.mxu0 %v942
    %954 = vmatpush.bf16.msra.mxu0 %v941
    %955 = vmatpush.bf16.msra.mxu0 %v940
    %956 = vmatpush.bf16.msra.mxu0 %v939
    %957 = vmatpush.bf16.msra.mxu0 %v938
    %958 = vmatpush.bf16.msra.mxu0 %v937
    %959 = vmatpush.bf16.msra.mxu0 %v936
    %960 = vmatmul.bf16.gmra.mxu0 %v883
    %v961 = vpop.f32.mrf.mxu0
    %v962 = vadd.f32 %v902, %v961
    %v963 = vpop.f32.mrf.mxu0
    %v964 = vadd.f32 %v902, %v963
    %965 = vdwg.mxu0
    %v966 = vmax.f32 %v962, 0.0
    %v967 = vmax.f32 %v964, 0.0
    %v968 = vpack.c.bf16 %v967, %v966
    %v969 = vld [vmem:[%s9] sm:$0xf]
    %v970 = vld [vmem:[%s9 + $0x4] sm:$0xf]
    %v971 = vld [vmem:[%s9 + $0x8] sm:$0xf]
    %v972 = vld [vmem:[%s9 + $0xc] sm:$0xf]
    %v973 = vld [vmem:[%s9 + $0x10] sm:$0xf]
    %v974 = vld [vmem:[%s9 + $0x14] sm:$0xf]
    %v975 = vld [vmem:[%s9 + $0x18] sm:$0xf]
    %v976 = vld [vmem:[%s9 + $0x1c] sm:$0xf]
    %v977 = vld [vmem:[%s10] sm:$0x1]
    %v979 = vperm.slane %v977, 0
    %v989 = vunpack.c.l.b16 %v969
    %v990 = vunpack.c.l.b16 %v970
    %v991 = vunpack.c.l.b16 %v971
    %v992 = vunpack.c.l.b16 %v972
    %v993 = vunpack.c.l.b16 %v973
    %v994 = vunpack.c.l.b16 %v974
    %v995 = vunpack.c.l.b16 %v975
    %v996 = vunpack.c.l.b16 %v976
    %v997 = vpack.c.b16 %v990, %v989
    %v998 = vpack.c.b16 %v992, %v991
    %v999 = vpack.c.b16 %v994, %v993
    %v1000 = vpack.c.b16 %v996, %v995
    %vm1005 = vcmask 523264
    %v1007 = vsel %vm1005, %v968, 0
    %1009 = vmatpush.bf16.msra.mxu0 0
    %1010 = vmatpush.bf16.msra.mxu0 0
    %1011 = vmatpush.bf16.msra.mxu0 0
    %1012 = vmatpush.bf16.msra.mxu0 0
    %1013 = vmatpush.bf16.msra.mxu0 %v1000
    %1014 = vmatpush.bf16.msra.mxu0 %v999
    %1015 = vmatpush.bf16.msra.mxu0 %v998
    %1016 = vmatpush.bf16.msra.mxu0 %v997
    %1017 = vmatmul.bf16.gmra.mxu0 %v1007
    %v1018 = vpop.f32.mrf.mxu0
    %v1019 = vadd.f32 %v979, %v1018
    %v1020 = vpop.f32.mrf.mxu0
    %v1021 = vadd.f32 %v979, %v1020
    %1022 = vdwg.mxu0
    %vm1023 = vcmask 15360
    %1024 = vst.msk [vmem:[%s11] sm:$0xff] %vm1023, %v1019
    %1025 = vst.msk [vmem:[%s11 + $0x8] sm:$0xff] %vm1023, %v1021
    // Predicated region
    $region62: #{tpu_custom_call.1} parent=1 // pred_check
      _
    $region63: #{tpu_custom_call.1} parent=1 // pred_check_branch
      %1027 = sbr.rel (0) target = $region65
    $region64: #{tpu_custom_call.1} parent=1 // pred_region
      _
    $region65: #{tpu_custom_call.1} parent=1 // pred_fallthru
      _
    // Predicated region
    $region66: #{tpu_custom_call.1} parent=1 // pred_check
      _
    $region67: #{tpu_custom_call.1} parent=1 // pred_check_branch
      %1029 = sbr.rel (0) target = $region69
    $region68: #{tpu_custom_call.1} parent=1 // pred_region
      _
    $region69: #{tpu_custom_call.1} parent=1 // pred_fallthru
      _
    %1030 = vsyncpa [#allocation3], 1
    %1031 = vsyncpa [#allocation5], 1
    %1032 = vsyncpa [#allocation8], 1

</llo_original>
